<compile_context>
chip_gen: v7x
topology: tpu7x:2x2x1
jax: 0.10.0
libtpu: 0.0.40
codegen_flags: <defaults>
</compile_context>

<pallas_src>
import jax
import jax.numpy as jnp
from jax.experimental import pallas as pl
from jax.experimental.pallas import tpu as pltpu

LANES = 1024            # lane-dense last dim: large multiple of 128
DEFAULT_TILE_ROWS = 512  # (512, 1024) f32 = 2 MiB per tile
SMALL_N_THRESHOLD = 2048  # below this, plain JAX beats any Pallas launch


def _linear_kernel(w_ref, b_ref, x_ref, o_ref):
    # w_ref, b_ref: (1, 1) f32 scalars in SMEM; x_ref, o_ref: (tile_r, LANES) f32 in VMEM.
    w = w_ref[0, 0]
    b = b_ref[0, 0]
    # Pure VPU fma on a full-width, lane-dense tile (memory-bound; unmasked vld/vst).
    o_ref[...] = x_ref[...] * w + b


def linear_forward(x, w, b, *, tile_r=DEFAULT_TILE_ROWS):
    """x: (N, 1) f32, w: (1, 1) f32, b: (1,) f32 -> (N, 1) f32."""
    n = x.shape[0]
    x = x.astype(jnp.float32)
    w2 = w.reshape(1, 1).astype(jnp.float32)
    b2 = b.reshape(1, 1).astype(jnp.float32)

    # Fast path: tiny batches are pure launch overhead for a Pallas kernel.
    if n < SMALL_N_THRESHOLD:
        return x * w2 + b2

    # ---- Lane-dense slab layout ----
    # rows of a (rows, LANES) slab, padded so rows is a multiple of 8 sublanes
    rows = pl.cdiv(n, LANES)
    rows = ((rows + 7) // 8) * 8
    # tile over rows; pad rows up to a multiple of the tile so the grid divides exactly
    tile_r = min(tile_r, rows)
    assert tile_r % 8 == 0, "row tile must be a multiple of 8 sublanes"
    rows = ((rows + tile_r - 1) // tile_r) * tile_r
    n_pad = rows * LANES

    x_slab = jnp.pad(x.reshape(-1), (0, n_pad - n)).reshape(rows, LANES)
    grid = (rows // tile_r,)

    y_slab = pl.pallas_call(
        _linear_kernel,
        out_shape=jax.ShapeDtypeStruct((rows, LANES), jnp.float32),
        grid=grid,
        in_specs=[
            pl.BlockSpec(memory_space=pltpu.MemorySpace.SMEM),  # w (scalar)
            pl.BlockSpec(memory_space=pltpu.MemorySpace.SMEM),  # b (scalar)
            pl.BlockSpec((tile_r, LANES), lambda i: (i, 0),
                         memory_space=pltpu.MemorySpace.VMEM),   # x tile
        ],
        out_specs=pl.BlockSpec((tile_r, LANES), lambda i: (i, 0),
                               memory_space=pltpu.MemorySpace.VMEM),
        compiler_params=pltpu.CompilerParams(
            dimension_semantics=("parallel",),  # shard rows across v7x's 2 TCs
        ),
    )(w2, b2, x_slab)

    # Strip the padded tail and restore the (N, 1) layout.
    return y_slab.reshape(-1)[:n].reshape(n, 1)


if __name__ == "__main__":
    key = jax.random.PRNGKey(0)
    kx, kw, kb = jax.random.split(key, 3)

    # Deterministic parameter init mimicking nn.Linear(1, 1) default
    # (uniform in [-1/sqrt(in_features), 1/sqrt(in_features)] = [-1, 1]).
    w = jax.random.uniform(kw, (1, 1), dtype=jnp.float32, minval=-1.0, maxval=1.0)
    b = jax.random.uniform(kb, (1,), dtype=jnp.float32, minval=-1.0, maxval=1.0)

    # 1) Tiny batch (scale of the original PyTorch example) -> plain-JAX fast path.
    x_small = jax.random.normal(kx, (8, 1), dtype=jnp.float32)
    y_small = linear_forward(x_small, w, b)
    jax.block_until_ready(y_small)
    assert y_small.shape == (8, 1)
    assert jnp.allclose(y_small, x_small @ w.T + b, atol=1e-6), "small-batch mismatch"

    # 2) Larger batch -> Pallas path (lane-dense slab, padded N, multi-step grid).
    #    N deliberately not a multiple of LANES to exercise the padding + tail slice.
    n_big = 12345
    x_big = jax.random.normal(kx, (n_big, 1), dtype=jnp.float32)
    y_big = linear_forward(x_big, w, b, tile_r=8)  # small tile to force grid > 1 at demo size
    jax.block_until_ready(y_big)
    assert y_big.shape == (n_big, 1)
    assert jnp.allclose(y_big, x_big @ w.T + b, atol=1e-6), "pallas path mismatch"

    print("KERNEL_OK")
</pallas_src>

<mosaic_0001>
module attributes {stable_mosaic.version = 11 : i64} {
  func.func @_linear_kernel(%arg0: i32, %arg1: memref<1x1xf32, #tpu.memory_space<smem>>, %arg2: memref<1x1xf32, #tpu.memory_space<smem>>, %arg3: memref<8x1024xf32, #tpu.memory_space<vmem>>, %arg4: memref<8x1024xf32, #tpu.memory_space<vmem>>) attributes {dimension_semantics = [#tpu.dimension_semantics<parallel>], iteration_bounds = array<i64: 2>, scalar_prefetch = 0 : i64, scratch_operands = 0 : i64, tpu.core_type = #tpu.core_type<tc>, window_params = [{transform_indices = @transform_0, window_bounds = array<i64: 1, 1>}, {transform_indices = @transform_1, window_bounds = array<i64: 1, 1>}, {transform_indices = @transform_2, window_bounds = array<i64: 8, 1024>}, {transform_indices = @transform_3, window_bounds = array<i64: 8, 1024>}]} {
    %c0 = arith.constant 0 : index
    %c0_0 = arith.constant 0 : index
    %0 = memref.load %arg1[%c0, %c0_0] : memref<1x1xf32, #tpu.memory_space<smem>>
    %c0_1 = arith.constant 0 : index
    %c0_2 = arith.constant 0 : index
    %1 = memref.load %arg2[%c0_1, %c0_2] : memref<1x1xf32, #tpu.memory_space<smem>>
    %c0_3 = arith.constant 0 : index
    %c0_4 = arith.constant 0 : index
    %2 = vector.load %arg3[%c0_3, %c0_4] : memref<8x1024xf32, #tpu.memory_space<vmem>>, vector<8x1024xf32>
    %3 = vector.broadcast %0 : f32 to vector<8x1024xf32>
    %4 = arith.mulf %2, %3 : vector<8x1024xf32>
    %5 = vector.broadcast %1 : f32 to vector<8x1024xf32>
    %6 = arith.addf %4, %5 : vector<8x1024xf32>
    %c0_5 = arith.constant 0 : index
    %c0_6 = arith.constant 0 : index
    %7 = vector.load %arg4[%c0_5, %c0_6] : memref<8x1024xf32, #tpu.memory_space<vmem>>, vector<8x1024xf32>
    tpu.vector_store %arg4[%c0_5, %c0_6], %6 {strides = array<i32>} : memref<8x1024xf32, #tpu.memory_space<vmem>>, vector<8x1024xf32>,
    return
  }
  func.func @transform_0(%arg0: i32) -> (i32, i32) {
    %c0_i32 = arith.constant 0 : i32
    %c0_i32_0 = arith.constant 0 : i32
    %c0_i32_1 = arith.constant 0 : i32
    return %c0_i32, %c0_i32_0 : i32, i32
  }
  func.func @transform_1(%arg0: i32) -> (i32, i32) {
    %c0_i32 = arith.constant 0 : i32
    %c0_i32_0 = arith.constant 0 : i32
    %c0_i32_1 = arith.constant 0 : i32
    return %c0_i32, %c0_i32_0 : i32, i32
  }
  func.func @transform_2(%arg0: i32) -> (i32, i32) {
    %c0_i32 = arith.constant 0 : i32
    %c0_i32_0 = arith.constant 0 : i32
    return %arg0, %c0_i32 : i32, i32
  }
  func.func @transform_3(%arg0: i32) -> (i32, i32) {
    %c0_i32 = arith.constant 0 : i32
    %c0_i32_0 = arith.constant 0 : i32
    return %arg0, %c0_i32 : i32, i32
  }
}

</mosaic_0001>

<llo_original>
// kernel: tpu_custom_call.1
$region0: #{tpu_custom_call.1}
  #allocation0 [shape = 'u32[]', space=smem, size = 0x4, offset = 0x4, fixed_abs, tag = 'smem constant byte address 0x4 - core index']
  #allocation1 [shape = 'u32[144,128]{1,0:T(1,128)}', space=vmem, size = 0x12000, scoped, tag = 'internal scratch']
  #allocation2 [shape = 'f32[1,1]{1,0:T(1,128)S(6)}', space=smem, size = 0x200, scoped, tag = 'scoped memory for tpu_custom_call.1']
  #allocation3 [shape = 'f32[1,1]{1,0:T(1,128)S(6)}', space=smem, size = 0x200, scoped, tag = 'scoped memory for tpu_custom_call.1']
  %s0 = inlined_call_operand.<no memory space> [shape: f32[1,1], index: 0, kind: input, shape index: {}]
  %s1 = inlined_call_operand.<no memory space> [shape: f32[1,1], index: 1, kind: input, shape index: {}]
  %s2 = inlined_call_operand.hbm [shape: f32[16,1024], index: 2, kind: input, shape index: {}]
  %s3 = inlined_call_operand.hbm [shape: f32[16,1024], index: 3, kind: output, shape index: {}]
  %s4 = sld [smem:[#allocation0]]
  $region49: #{tpu_custom_call.1} parent=0
    _
  %s6 = ssub.s32 1, %s4
  %s7 = scalar_select 0, %s6, %s4
  %8 = sst [smem:[#allocation2]] %s0
  %9 = sst [smem:[#allocation3]] %s1
  $region1: #{tpu_custom_call.1} parent=0
    #allocation4 [shape = 'u8[65536]{0}', space=vmem, size = 0x10000, scoped, tag = 'input window, operand 2']
    #allocation5 [shape = 's32[2]{0}', space=sflag, size = 0x8, scoped, tag = 'scoped memory for tpu_custom_call.1']
    #allocation6 [shape = 's32[2]{0}', space=sflag, size = 0x8, scoped, tag = 'scoped memory for tpu_custom_call.1']
    #allocation7 [shape = 'u8[65536]{0}', space=vmem, size = 0x10000, scoped, tag = 'output window, operand 0']
    %10 = vsyncpa [#allocation5], 0
    %s11 = scalar_lea.sflag [#allocation5], 1
    %12 = vsyncpa %s11, 0
    %13 = vsyncpa [#allocation6], 0
    %s14 = scalar_lea.sflag [#allocation6], 1
    %15 = vsyncpa %s14, 0
    loop: start=0, step=1, limit=4
    $region2: #{tpu_custom_call.1} parent=1 // loop_pre_header
      _
    $region3: #{tpu_custom_call.1} parent=1 // loop_header
      %s17 = sphi 0, %s21
      %p18 = scmp.ge.s32.totalorder %s17, 4
      %s25 = sphi 0, %s25
      %s27 = sphi 0, %s25
      %s28 = sphi 0, %s27
      %s42 = sphi 0, %s28
      %s46 = sphi 0, %s46
      %s48 = sphi 0, %s46
      %s49 = sphi 0, %s48
      %s63 = sphi 0, %s49
      %s69 = sphi 0, %s71
      %s72 = sphi 0, %s69
      %s73 = sphi 0, %s72
      %s89 = sphi 0, %s73
      %s95 = sphi 0, %s97
      %s98 = sphi 0, %s95
      %s99 = sphi 0, %s98
      %s115 = sphi 0, %s99
    $region4: #{tpu_custom_call.1} parent=1 // loop_header_branch
      %20 = sbr.rel (%p18) target = $region8
    $region5: #{tpu_custom_call.1} parent=1 // loop_body
      %s22 = ssub.s32 %s17, 1
      %s23 = ssub.s32 %s17, 2
      %s24 = sadd.s32 %s17, 1
      %s26 = sadd.s32 %s25, 1
      %p29 = scmp.eq.s32.totalorder %s17, 1
      %p30 = scmp.ne.s32.totalorder %s25, %s27
      %p31 = scmp.eq.s32.totalorder %s17, 0
      %p32 = por %p30, %p31
      %p33 = scmp.ne.s32.totalorder %s25, %s27
      %p34 = scmp.eq.s32.totalorder %s22, 1
      %p35 = por %p33, %p34
      %p36 = scmp.ne.s32.totalorder %s27, %s28
      %p37 = scmp.eq.s32.totalorder %s22, 0
      %p38 = por %p36, %p37
      %p39 = scmp.ne.s32.totalorder %s27, %s28
      %p40 = scmp.eq.s32.totalorder %s23, 1
      %p41 = por %p39, %p40
      %p43 = scmp.ne.s32.totalorder %s28, %s42
      %p44 = scmp.eq.s32.totalorder %s23, 0
      %p45 = por %p43, %p44
      %s47 = sadd.s32 %s46, 1
      %p50 = scmp.eq.s32.totalorder %s17, 1
      %p51 = scmp.ne.s32.totalorder %s46, %s48
      %p52 = scmp.eq.s32.totalorder %s17, 0
      %p53 = por %p51, %p52
      %p54 = scmp.ne.s32.totalorder %s46, %s48
      %p55 = scmp.eq.s32.totalorder %s22, 1
      %p56 = por %p54, %p55
      %p57 = scmp.ne.s32.totalorder %s48, %s49
      %p58 = scmp.eq.s32.totalorder %s22, 0
      %p59 = por %p57, %p58
      %p60 = scmp.ne.s32.totalorder %s48, %s49
      %p61 = scmp.eq.s32.totalorder %s23, 1
      %p62 = por %p60, %p61
      %p64 = scmp.ne.s32.totalorder %s49, %s63
      %p65 = scmp.eq.s32.totalorder %s23, 0
      %p66 = por %p64, %p65
      %s67 = ssub.s32 %s17, %s24
      %p68 = scmp.eq.s32.totalorder %s67, 0
      %s70 = sadd.s32 %s69, 1
      %s71 = scalar_select %p68, %s69, %s70
      %p74 = pneg %p68
      %p75 = scmp.eq.s32.totalorder %s17, 1
      %p76 = por %p74, %p75
      %p77 = scmp.ne.s32.totalorder %s69, %s72
      %p78 = scmp.eq.s32.totalorder %s17, 0
      %p79 = por %p77, %p78
      %p80 = scmp.ne.s32.totalorder %s69, %s72
      %p81 = scmp.eq.s32.totalorder %s22, 1
      %p82 = por %p80, %p81
      %p83 = scmp.ne.s32.totalorder %s72, %s73
      %p84 = scmp.eq.s32.totalorder %s22, 0
      %p85 = por %p83, %p84
      %p86 = scmp.ne.s32.totalorder %s72, %s73
      %p87 = scmp.eq.s32.totalorder %s23, 1
      %p88 = por %p86, %p87
      %p90 = scmp.ne.s32.totalorder %s73, %s89
      %p91 = scmp.eq.s32.totalorder %s23, 0
      %p92 = por %p90, %p91
      %s93 = ssub.s32 %s17, %s24
      %p94 = scmp.eq.s32.totalorder %s93, 0
      %s96 = sadd.s32 %s95, 1
      %s97 = scalar_select %p94, %s95, %s96
      %p100 = pneg %p94
      %p101 = scmp.eq.s32.totalorder %s17, 1
      %p102 = por %p100, %p101
      %p103 = scmp.ne.s32.totalorder %s95, %s98
      %p104 = scmp.eq.s32.totalorder %s17, 0
      %p105 = por %p103, %p104
      %p106 = scmp.ne.s32.totalorder %s95, %s98
      %p107 = scmp.eq.s32.totalorder %s22, 1
      %p108 = por %p106, %p107
      %p109 = scmp.ne.s32.totalorder %s98, %s99
      %p110 = scmp.eq.s32.totalorder %s22, 0
      %p111 = por %p109, %p110
      %p112 = scmp.ne.s32.totalorder %s98, %s99
      %p113 = scmp.eq.s32.totalorder %s23, 1
      %p114 = por %p112, %p113
      %p116 = scmp.ne.s32.totalorder %s99, %s115
      %p117 = scmp.eq.s32.totalorder %s23, 0
      %p118 = por %p116, %p117
      %p119 = scmp.le.s32.totalorder 1, %s17
      %p120 = scmp.lt.s32.totalorder %s17, 3
      %p121 = pnand %p119, %p120
      %p122 = pneg %p121
      // Predicated region
      $region9: #{tpu_custom_call.1} parent=5 // pred_check
        _
      $region10: #{tpu_custom_call.1} parent=5 // pred_check_branch
        %124 = sbr.rel (%p121) target = $region12
      $region11: #{tpu_custom_call.1} parent=5 // pred_region
        %s125 = ssub.s32 %s17, 1
        // Predicated region
        $region13: #{tpu_custom_call.1} parent=11 // pred_check
          %p126 = pneg %p38
        $region14: #{tpu_custom_call.1} parent=11 // pred_check_branch
          %128 = sbr.rel (%p126) target = $region16
        $region15: #{tpu_custom_call.1} parent=11 // pred_region
          _
        $region16: #{tpu_custom_call.1} parent=11 // pred_fallthru
          _
        // Predicated region
        $region17: #{tpu_custom_call.1} parent=11 // pred_check
          %p129 = pneg %p59
        $region18: #{tpu_custom_call.1} parent=11 // pred_check_branch
          %131 = sbr.rel (%p129) target = $region20
        $region19: #{tpu_custom_call.1} parent=11 // pred_region
          _
        $region20: #{tpu_custom_call.1} parent=11 // pred_fallthru
          _
      $region12: #{tpu_custom_call.1} parent=5 // pred_fallthru
        _
      %p132 = scmp.lt.s32.totalorder %s17, 2
      // Predicated region
      $region21: #{tpu_custom_call.1} parent=5 // pred_check
        %p133 = pneg %p132
      $region22: #{tpu_custom_call.1} parent=5 // pred_check_branch
        %135 = sbr.rel (%p133) target = $region24
      $region23: #{tpu_custom_call.1} parent=5 // pred_region
        // Predicated region
        $region25: #{tpu_custom_call.1} parent=23 // pred_check
          %p136 = pneg %p79
        $region26: #{tpu_custom_call.1} parent=23 // pred_check_branch
          %138 = sbr.rel (%p136) target = $region28
        $region27: #{tpu_custom_call.1} parent=23 // pred_region
          %s139 = sand.u32 %s69, 1
          %s140 = scalar_lea.sflag [#allocation5], %s139
          %s141 = sand.u32 %s69, 1
          %s142 = smul.addr %s141, 64
          %s143 = scalar_lea.vmem [#allocation4], %s142
          %s145 = ssub.s32 1024, 1024
          %146 = vsyncadd %s140, %s145
          %s147 = smul.addr %s17, 8
          %s148 = smul.addr %s147, 128
          %s149 = scalar_lea.hbm %s2, %s148
          %s151 = sshll.u32 %s143, 4
          %s152 = int_to_ptr.vmem [resolvable:$true] %s151
          %154 = dma.hbm_to_vmem [thread:$0]  %s149, 1024, %s152, %s140
        $region28: #{tpu_custom_call.1} parent=23 // pred_fallthru
          _
      $region24: #{tpu_custom_call.1} parent=5 // pred_fallthru
        _
      %p155 = scmp.le.s32.totalorder 1, %s17
      %p156 = scmp.lt.s32.totalorder %s17, 3
      %p157 = pnand %p155, %p156
      %p158 = pneg %p157
      // Predicated region
      $region29: #{tpu_custom_call.1} parent=5 // pred_check
        _
      $region30: #{tpu_custom_call.1} parent=5 // pred_check_branch
        %160 = sbr.rel (%p157) target = $region32
      $region31: #{tpu_custom_call.1} parent=5 // pred_region
        %s161 = ssub.s32 %s17, 1
        %s162 = sand.u32 %s72, 1
        %s163 = scalar_lea.sflag [#allocation5], %s162
        %s164 = sand.u32 %s72, 1
        %s165 = smul.addr %s164, 64
        %s166 = scalar_lea.vmem [#allocation4], %s165
        // Predicated region
        $region33: #{tpu_custom_call.1} parent=31 // pred_check
          %p167 = pneg %p85
        $region34: #{tpu_custom_call.1} parent=31 // pred_check_branch
          %169 = sbr.rel (%p167) target = $region36
        $region35: #{tpu_custom_call.1} parent=31 // pred_region
          %170 = dma.done %s163, 1024
        $region36: #{tpu_custom_call.1} parent=31 // pred_fallthru
          _
        %p171 = pneg %p38
        %p172 = pneg %p35
        %p173 = pneg %p59
        %p174 = pneg %p56
        %s175 = sand.u32 %s72, 1
        %s176 = scalar_lea.sflag [#allocation5], %s175
        %s177 = sand.u32 %s72, 1
        %s178 = smul.addr %s177, 64
        %s179 = scalar_lea.vmem [#allocation4], %s178
        %p180 = pneg %p85
        %p181 = pneg %p82
        %p182 = pneg %p111
        %p183 = pneg %p108
        %s184 = sand.u32 %s98, 1
        %s185 = scalar_lea.sflag [#allocation6], %s184
        %s186 = sand.u32 %s98, 1
        %s187 = smul.addr %s186, 64
        %s188 = scalar_lea.vmem [#allocation7], %s187
        %s189 = sld [smem:[#allocation2]]
        %s190 = sld [smem:[#allocation3]]
        %v191 = vld [vmem:[%s166] sm:$0xff]
        %v192 = vld [vmem:[%s166 + $0x8] sm:$0xff]
        %v193 = vld [vmem:[%s166 + $0x10] sm:$0xff]
        %v194 = vld [vmem:[%s166 + $0x18] sm:$0xff]
        %v195 = vld [vmem:[%s166 + $0x20] sm:$0xff]
        %v196 = vld [vmem:[%s166 + $0x28] sm:$0xff]
        %v197 = vld [vmem:[%s166 + $0x30] sm:$0xff]
        %v198 = vld [vmem:[%s166 + $0x38] sm:$0xff]
        %v199 = vstv %s189
        %v200 = vmul.f32 %v191, %v199
        %v201 = vmul.f32 %v192, %v199
        %v202 = vmul.f32 %v193, %v199
        %v203 = vmul.f32 %v194, %v199
        %v204 = vmul.f32 %v195, %v199
        %v205 = vmul.f32 %v196, %v199
        %v206 = vmul.f32 %v197, %v199
        %v207 = vmul.f32 %v198, %v199
        %v208 = vstv %s190
        %v209 = vadd.f32 %v200, %v208
        %v210 = vadd.f32 %v201, %v208
        %v211 = vadd.f32 %v202, %v208
        %v212 = vadd.f32 %v203, %v208
        %v213 = vadd.f32 %v204, %v208
        %v214 = vadd.f32 %v205, %v208
        %v215 = vadd.f32 %v206, %v208
        %v216 = vadd.f32 %v207, %v208
        %217 = vst [vmem:[%s188] sm:$0xff] %v209
        %218 = vst [vmem:[%s188 + $0x8] sm:$0xff] %v210
        %219 = vst [vmem:[%s188 + $0x10] sm:$0xff] %v211
        %220 = vst [vmem:[%s188 + $0x18] sm:$0xff] %v212
        %221 = vst [vmem:[%s188 + $0x20] sm:$0xff] %v213
        %222 = vst [vmem:[%s188 + $0x28] sm:$0xff] %v214
        %223 = vst [vmem:[%s188 + $0x30] sm:$0xff] %v215
        %224 = vst [vmem:[%s188 + $0x38] sm:$0xff] %v216
        %s225 = sand.u32 %s98, 1
        %s226 = scalar_lea.sflag [#allocation6], %s225
        %s227 = sand.u32 %s98, 1
        %s228 = smul.addr %s227, 64
        %s229 = scalar_lea.vmem [#allocation7], %s228
        // Predicated region
        $region37: #{tpu_custom_call.1} parent=31 // pred_check
          %p230 = pneg %p108
        $region38: #{tpu_custom_call.1} parent=31 // pred_check_branch
          %232 = sbr.rel (%p230) target = $region40
        $region39: #{tpu_custom_call.1} parent=31 // pred_region
          %s234 = ssub.s32 1024, 1024
          %235 = vsyncadd %s226, %s234
          %s236 = smul.addr %s22, 8
          %s237 = smul.addr %s236, 128
          %s238 = scalar_lea.hbm %s3, %s237
          %s240 = sshll.u32 %s229, 4
          %s241 = int_to_ptr.vmem [resolvable:$true] %s240
          %243 = dma.vmem_to_hbm [thread:$0]  %s241, 1024, %s238, %s226
        $region40: #{tpu_custom_call.1} parent=31 // pred_fallthru
          _
      $region32: #{tpu_custom_call.1} parent=5 // pred_fallthru
        _
      %p244 = scmp.le.s32.totalorder 2, %s17
      // Predicated region
      $region41: #{tpu_custom_call.1} parent=5 // pred_check
        %p245 = pneg %p244
      $region42: #{tpu_custom_call.1} parent=5 // pred_check_branch
        %247 = sbr.rel (%p245) target = $region44
      $region43: #{tpu_custom_call.1} parent=5 // pred_region
        %s248 = ssub.s32 %s17, 2
        // Predicated region
        $region45: #{tpu_custom_call.1} parent=43 // pred_check
          %p249 = pneg %p114
        $region46: #{tpu_custom_call.1} parent=43 // pred_check_branch
          %251 = sbr.rel (%p249) target = $region48
        $region47: #{tpu_custom_call.1} parent=43 // pred_region
          %s252 = sand.u32 %s99, 1
          %s253 = scalar_lea.sflag [#allocation6], %s252
          %s254 = sand.u32 %s99, 1
          %s255 = smul.addr %s254, 64
          %s256 = scalar_lea.vmem [#allocation7], %s255
          %257 = dma.done %s253, 1024
        $region48: #{tpu_custom_call.1} parent=43 // pred_fallthru
          _
      $region44: #{tpu_custom_call.1} parent=5 // pred_fallthru
        _
    $region6: #{tpu_custom_call.1} parent=1 // loop_footer
      %s21 = sadd.s32 1, %s17
    $region7: #{tpu_custom_call.1} parent=1 // loop_footer_branch
      %16 = sbr.rel target = $region3
    $region8: #{tpu_custom_call.1} parent=1 // loop_exit
      _
    %258 = vsyncpa [#allocation5], 1
    %s259 = scalar_lea.sflag [#allocation5], 1
    %260 = vsyncpa %s259, 1
    %261 = vsyncpa [#allocation6], 1
    %s262 = scalar_lea.sflag [#allocation6], 1
    %263 = vsyncpa %s262, 1

</llo_original>
